<compile_context>
chip_gen: v5e
topology: v5e:2x2
jax: 0.10.0
libtpu: 0.0.40
codegen_flags: <defaults>
</compile_context>

<pallas_src>
import math
import functools

import jax
import jax.numpy as jnp
from jax.experimental import pallas as pl
from jax.experimental.pallas import tpu as pltpu


def _self_attention_kernel(*refs, n_heads: int, seq_len: int, shared_qkv: bool):
    """Grid = (batch_blocks,). One step == all heads of one batch block.

    x refs  : (rows, H) bf16 rows of the flattened q/k/v inputs (1 ref if shared)
    wqkv_ref: (3, H, H) bf16  pre-transposed Q/K/V weights (scale folded into wq)
    bqkv_ref: (3, 1, H) f32   Q/K/V biases (scale folded into bq)
    wfc_ref : (H, H)    bf16  fc.weight.T
    bfc_ref : (1, H)    f32   fc bias
    out_ref : (rows, H) f32
    ctx_ref : (rows, H) f32   per-head context assembly scratch
    """
    if shared_qkv:
        x_ref, wqkv_ref, bqkv_ref, wfc_ref, bfc_ref, out_ref, ctx_ref = refs
        xq_ref = xk_ref = xv_ref = x_ref
    else:
        (xq_ref, xk_ref, xv_ref,
         wqkv_ref, bqkv_ref, wfc_ref, bfc_ref, out_ref, ctx_ref) = refs

    rows, hid = out_ref.shape
    head_dim = hid // n_heads
    bb = rows // seq_len

    # Full-width Q/K/V projections (bf16 MXU, f32 accumulation) once per batch
    # block; results drop back to bf16 for the per-head attention matmuls.
    q = (jnp.dot(xq_ref[...], wqkv_ref[0], preferred_element_type=jnp.float32)
         + bqkv_ref[0]).astype(jnp.bfloat16).reshape(bb, seq_len, hid)
    k = (jnp.dot(xk_ref[...], wqkv_ref[1], preferred_element_type=jnp.float32)
         + bqkv_ref[1]).astype(jnp.bfloat16).reshape(bb, seq_len, hid)
    v = (jnp.dot(xv_ref[...], wqkv_ref[2], preferred_element_type=jnp.float32)
         + bqkv_ref[2]).astype(jnp.bfloat16).reshape(bb, seq_len, hid)

    # Static per-head loop: all operands already resident in VMEM; slices are
    # compile-time column ranges. 1/sqrt(head_dim) was folded into wq/bq.
    for h in range(n_heads):
        cols = slice(h * head_dim, (h + 1) * head_dim)
        qh, kh, vh = q[:, :, cols], k[:, :, cols], v[:, :, cols]

        # energy[b, i, j] = <q_i, k_j>  (contract last dims, no transpose)
        energy = jnp.einsum("bqd,bkd->bqk", qh, kh,
                            preferred_element_type=jnp.float32)
        energy = energy - jnp.max(energy, axis=-1, keepdims=True)
        p = jnp.exp(energy)
        p = p * pl.reciprocal(jnp.sum(p, axis=-1, keepdims=True), approx=True)

        ctx = jnp.einsum("bqk,bkd->bqd", p.astype(jnp.bfloat16), vh,
                         preferred_element_type=jnp.float32)       # (bb, S, hd)
        ctx_ref[:, cols] = ctx.reshape(rows, head_dim)

    # Single full-width output projection (full MXU K fill) + bias.
    out = jnp.dot(ctx_ref[...].astype(jnp.bfloat16), wfc_ref[...],
                  preferred_element_type=jnp.float32) + bfc_ref[...]
    out_ref[...] = out.astype(out_ref.dtype)


def _pick_block_b(B, S, H, *, n_in, budget):
    """Largest block_b (batch elems per grid step) that fits the VMEM budget,
    keeps rows = block_b*S sublane-aligned, and (when B > 1) leaves >= 2 grid
    steps so both v7x TensorCores get parallel work."""
    def est_bytes(bb):
        rows = bb * S
        per_elem = (n_in * 2 * 2      # bf16 inputs, double-buffered
                    + 2 * 4           # f32 output, double-buffered
                    + 4               # f32 ctx scratch
                    + 3 * 2 + 3 * 4)  # q/k/v bf16 temps + transient f32 results
        return rows * H * per_elem + bb * S * S * 2 * 4   # + energy/p f32

    divisors = [d for d in range(1, B + 1) if B % d == 0]

    def ok_shape(bb):
        return (bb * S) % 8 == 0 or bb == B

    # pass 1: fits budget, >= 2 grid steps (when B > 1), sublane-aligned.
    cands = [d for d in divisors if ok_shape(d) and est_bytes(d) <= budget
             and (B == 1 or d <= B // 2)]
    if cands:
        return max(cands)
    # pass 2: relax the >= 2-steps preference.
    cands = [d for d in divisors if ok_shape(d) and est_bytes(d) <= budget]
    if cands:
        return max(cands)
    # pass 3: nothing fits the budget -- take the smallest legal block.
    # TODO(synk): flash-style kv tiling needed here for very large S.
    cands = [d for d in divisors if ok_shape(d)]
    return min(cands) if cands else B


def self_attention_pallas(query, key, value, params, *, n_heads: int, block_b=None):
    """query/key/value: [B, S, H] float32.  params: PyTorch-layout weights/biases."""
    B, S, H = query.shape
    assert H % n_heads == 0
    assert key.shape == query.shape and value.shape == query.shape
    head_dim = H // n_heads
    inv_scale = 1.0 / math.sqrt(head_dim)
    shared_qkv = (key is query) and (value is query)

    # ---- host-side weight prep: transpose (y = x @ w), fold 1/sqrt(hd) into
    # wq/bq, cast MXU operands to bf16, stack Q/K/V into one DMA stream. ----
    wqkv = jnp.stack([params["wq"].T * inv_scale,
                      params["wk"].T,
                      params["wv"].T]).astype(jnp.bfloat16)           # (3, H, H)
    bqkv = jnp.stack([params["bq"] * inv_scale,
                      params["bk"],
                      params["bv"]]).astype(jnp.float32).reshape(3, 1, H)
    wfc = params["wfc"].T.astype(jnp.bfloat16)                        # (H, H)
    bfc = params["bfc"].astype(jnp.float32).reshape(1, H)

    xq = query.reshape(B * S, H).astype(jnp.bfloat16)
    if shared_qkv:
        xs = (xq,)
    else:
        xs = (xq,
              key.reshape(B * S, H).astype(jnp.bfloat16),
              value.reshape(B * S, H).astype(jnp.bfloat16))

    # ---- per-generation VMEM sizing (v7x: 64 MiB phys; v5e/v6e: 128 MiB). ----
    try:
        vmem_cap = int(getattr(pltpu.get_tpu_info(), "vmem_capacity_bytes", 0)) \
            or 64 * 1024 * 1024
    except Exception:
        vmem_cap = 64 * 1024 * 1024
    vmem_limit = int(min(vmem_cap * 3 // 4, 96 * 1024 * 1024))

    if block_b is None:
        block_b = _pick_block_b(B, S, H, n_in=len(xs), budget=int(vmem_limit * 0.8))
    assert B % block_b == 0
    rows = block_b * S
    assert rows % 8 == 0 or block_b == B, (
        f"rows={rows} must be a multiple of 8 (pad S or adjust block_b)")

    x_spec = pl.BlockSpec((rows, H), lambda b: (b, 0))
    in_specs = [x_spec] * len(xs) + [
        pl.BlockSpec((3, H, H), lambda b: (0, 0, 0)),   # grid-invariant, resident
        pl.BlockSpec((3, 1, H), lambda b: (0, 0, 0)),
        pl.BlockSpec((H, H), lambda b: (0, 0)),
        pl.BlockSpec((1, H), lambda b: (0, 0)),
    ]
    out_spec = pl.BlockSpec((rows, H), lambda b: (b, 0))

    kernel = functools.partial(_self_attention_kernel,
                               n_heads=n_heads, seq_len=S, shared_qkv=shared_qkv)

    out = pl.pallas_call(
        kernel,
        out_shape=jax.ShapeDtypeStruct((B * S, H), query.dtype),
        grid_spec=pltpu.PrefetchScalarGridSpec(
            num_scalar_prefetch=0,
            grid=(B // block_b,),
            in_specs=in_specs,
            out_specs=out_spec,
            scratch_shapes=[pltpu.VMEM((rows, H), jnp.float32)]),    # ctx scratch
        compiler_params=pltpu.CompilerParams(
            dimension_semantics=("parallel",),
            vmem_limit_bytes=vmem_limit),
    )(*xs, wqkv, bqkv, wfc, bfc)

    return out.reshape(B, S, H)


def self_attention_ref(query, key, value, params, *, n_heads: int):
    """Pure-JAX f32 reference mirroring the PyTorch forward (mask=None, eval)."""
    B, S, H = query.shape
    hd = H // n_heads
    Q = query @ params["wq"].T + params["bq"]
    K = key @ params["wk"].T + params["bk"]
    V = value @ params["wv"].T + params["bv"]
    Q = Q.reshape(B, S, n_heads, hd).transpose(0, 2, 1, 3)
    K = K.reshape(B, S, n_heads, hd).transpose(0, 2, 1, 3)
    V = V.reshape(B, S, n_heads, hd).transpose(0, 2, 1, 3)
    energy = jnp.einsum("bhqd,bhkd->bhqk", Q, K) / jnp.sqrt(jnp.float32(hd))
    attn = jax.nn.softmax(energy, axis=-1)
    x = jnp.einsum("bhqk,bhkd->bhqd", attn, V)
    x = x.transpose(0, 2, 1, 3).reshape(B, S, H)
    return x @ params["wfc"].T + params["bfc"]


def init_params(key, hid_dim):
    """Deterministic init mimicking nn.Linear default (uniform +/- 1/sqrt(in))."""
    bound = 1.0 / math.sqrt(hid_dim)
    names = ["wq", "bq", "wk", "bk", "wv", "bv", "wfc", "bfc"]
    keys = jax.random.split(key, len(names))
    params = {}
    for name, k in zip(names, keys):
        shape = (hid_dim, hid_dim) if name.startswith("w") else (hid_dim,)
        params[name] = jax.random.uniform(
            k, shape, dtype=jnp.float32, minval=-bound, maxval=bound)
    return params


if __name__ == "__main__":
    B, S, H, NH = 2, 8, 32, 4

    root = jax.random.PRNGKey(0)
    kp, kq, kk, kv = jax.random.split(root, 4)
    params = init_params(kp, H)

    query = jax.random.normal(kq, (B, S, H), dtype=jnp.float32)
    key_ = jax.random.normal(kk, (B, S, H), dtype=jnp.float32)
    value = jax.random.normal(kv, (B, S, H), dtype=jnp.float32)

    out = self_attention_pallas(query, key_, value, params, n_heads=NH)
    out = jax.block_until_ready(out)

    ref = self_attention_ref(query, key_, value, params, n_heads=NH)
    assert out.shape == (B, S, H)
    # bf16 MXU operands (f32 accumulation) + EUP approx reciprocal in the softmax
    # -> looser tolerance vs. the exact f32 reference.
    assert jnp.allclose(out, ref, atol=2e-2, rtol=2e-2), "mismatch vs reference"

    print("KERNEL_OK")
</pallas_src>

<mosaic_0001>
module attributes {stable_mosaic.version = 11 : i64} {
  func.func @_self_attention_kernel(%arg0: i32, %arg1: memref<8x32xbf16, #tpu.memory_space<vmem>>, %arg2: memref<8x32xbf16, #tpu.memory_space<vmem>>, %arg3: memref<8x32xbf16, #tpu.memory_space<vmem>>, %arg4: memref<3x32x32xbf16, #tpu.memory_space<vmem>>, %arg5: memref<3x1x32xf32, #tpu.memory_space<vmem>>, %arg6: memref<32x32xbf16, #tpu.memory_space<vmem>>, %arg7: memref<1x32xf32, #tpu.memory_space<vmem>>, %arg8: memref<8x32xf32, #tpu.memory_space<vmem>>, %arg9: memref<8x32xf32, #tpu.memory_space<vmem>>) attributes {dimension_semantics = [#tpu.dimension_semantics<parallel>], iteration_bounds = array<i64: 2>, scalar_prefetch = 0 : i64, scratch_operands = 1 : i64, tpu.core_type = #tpu.core_type<tc>, window_params = [{transform_indices = @transform_0, window_bounds = array<i64: 8, 32>}, {transform_indices = @transform_1, window_bounds = array<i64: 8, 32>}, {transform_indices = @transform_2, window_bounds = array<i64: 8, 32>}, {pipeline_mode = #tpu.pipeline_mode<synchronous>, transform_indices = @transform_3, window_bounds = array<i64: 3, 32, 32>}, {pipeline_mode = #tpu.pipeline_mode<synchronous>, transform_indices = @transform_4, window_bounds = array<i64: 3, 1, 32>}, {pipeline_mode = #tpu.pipeline_mode<synchronous>, transform_indices = @transform_5, window_bounds = array<i64: 32, 32>}, {pipeline_mode = #tpu.pipeline_mode<synchronous>, transform_indices = @transform_6, window_bounds = array<i64: 1, 32>}, {transform_indices = @transform_7, window_bounds = array<i64: 8, 32>}]} {
    %c0 = arith.constant 0 : index
    %c0_0 = arith.constant 0 : index
    %0 = vector.load %arg1[%c0, %c0_0] : memref<8x32xbf16, #tpu.memory_space<vmem>>, vector<8x32xbf16>
    %c0_1 = arith.constant 0 : index
    %c0_2 = arith.constant 0 : index
    %c0_3 = arith.constant 0 : index
    %1 = vector.load %arg4[%c0_1, %c0_2, %c0_3] : memref<3x32x32xbf16, #tpu.memory_space<vmem>>, vector<1x32x32xbf16>
    %2 = vector.shape_cast %1 : vector<1x32x32xbf16> to vector<32x32xbf16>
    %cst = arith.constant dense<0.000000e+00> : vector<8x32xf32>
    %3 = tpu.matmul %0, %2, %cst {dimension_numbers = #tpu.dot_dimension_numbers<[1], [0], [0], [1], [0, 0, 1, 1], [], []>} : vector<8x32xbf16>, vector<32x32xbf16>, vector<8x32xf32> -> vector<8x32xf32>
    %c0_4 = arith.constant 0 : index
    %c0_5 = arith.constant 0 : index
    %c0_6 = arith.constant 0 : index
    %4 = vector.load %arg5[%c0_4, %c0_5, %c0_6] : memref<3x1x32xf32, #tpu.memory_space<vmem>>, vector<1x1x32xf32>
    %5 = vector.shape_cast %4 : vector<1x1x32xf32> to vector<1x32xf32>
    %6 = vector.broadcast %5 : vector<1x32xf32> to vector<8x32xf32>
    %7 = arith.addf %3, %6 : vector<8x32xf32>
    %8 = arith.truncf %7 : vector<8x32xf32> to vector<8x32xbf16>
    %9 = vector.shape_cast %8 : vector<8x32xbf16> to vector<1x8x32xbf16>
    %c0_7 = arith.constant 0 : index
    %c0_8 = arith.constant 0 : index
    %10 = vector.load %arg2[%c0_7, %c0_8] : memref<8x32xbf16, #tpu.memory_space<vmem>>, vector<8x32xbf16>
    %c1 = arith.constant 1 : index
    %c0_9 = arith.constant 0 : index
    %c0_10 = arith.constant 0 : index
    %11 = vector.load %arg4[%c1, %c0_9, %c0_10] : memref<3x32x32xbf16, #tpu.memory_space<vmem>>, vector<1x32x32xbf16>
    %12 = vector.shape_cast %11 : vector<1x32x32xbf16> to vector<32x32xbf16>
    %cst_11 = arith.constant dense<0.000000e+00> : vector<8x32xf32>
    %13 = tpu.matmul %10, %12, %cst_11 {dimension_numbers = #tpu.dot_dimension_numbers<[1], [0], [0], [1], [0, 0, 1, 1], [], []>} : vector<8x32xbf16>, vector<32x32xbf16>, vector<8x32xf32> -> vector<8x32xf32>
    %c1_12 = arith.constant 1 : index
    %c0_13 = arith.constant 0 : index
    %c0_14 = arith.constant 0 : index
    %14 = vector.load %arg5[%c1_12, %c0_13, %c0_14] : memref<3x1x32xf32, #tpu.memory_space<vmem>>, vector<1x1x32xf32>
    %15 = vector.shape_cast %14 : vector<1x1x32xf32> to vector<1x32xf32>
    %16 = vector.broadcast %15 : vector<1x32xf32> to vector<8x32xf32>
    %17 = arith.addf %13, %16 : vector<8x32xf32>
    %18 = arith.truncf %17 : vector<8x32xf32> to vector<8x32xbf16>
    %19 = vector.shape_cast %18 : vector<8x32xbf16> to vector<1x8x32xbf16>
    %c0_15 = arith.constant 0 : index
    %c0_16 = arith.constant 0 : index
    %20 = vector.load %arg3[%c0_15, %c0_16] : memref<8x32xbf16, #tpu.memory_space<vmem>>, vector<8x32xbf16>
    %c2 = arith.constant 2 : index
    %c0_17 = arith.constant 0 : index
    %c0_18 = arith.constant 0 : index
    %21 = vector.load %arg4[%c2, %c0_17, %c0_18] : memref<3x32x32xbf16, #tpu.memory_space<vmem>>, vector<1x32x32xbf16>
    %22 = vector.shape_cast %21 : vector<1x32x32xbf16> to vector<32x32xbf16>
    %cst_19 = arith.constant dense<0.000000e+00> : vector<8x32xf32>
    %23 = tpu.matmul %20, %22, %cst_19 {dimension_numbers = #tpu.dot_dimension_numbers<[1], [0], [0], [1], [0, 0, 1, 1], [], []>} : vector<8x32xbf16>, vector<32x32xbf16>, vector<8x32xf32> -> vector<8x32xf32>
    %c2_20 = arith.constant 2 : index
    %c0_21 = arith.constant 0 : index
    %c0_22 = arith.constant 0 : index
    %24 = vector.load %arg5[%c2_20, %c0_21, %c0_22] : memref<3x1x32xf32, #tpu.memory_space<vmem>>, vector<1x1x32xf32>
    %25 = vector.shape_cast %24 : vector<1x1x32xf32> to vector<1x32xf32>
    %26 = vector.broadcast %25 : vector<1x32xf32> to vector<8x32xf32>
    %27 = arith.addf %23, %26 : vector<8x32xf32>
    %28 = arith.truncf %27 : vector<8x32xf32> to vector<8x32xbf16>
    %29 = vector.shape_cast %28 : vector<8x32xbf16> to vector<1x8x32xbf16>
    %30 = vector.extract_strided_slice %9 {offsets = [0, 0, 0], sizes = [1, 8, 8], strides = [1, 1, 1]} : vector<1x8x32xbf16> to vector<1x8x8xbf16>
    %31 = vector.extract_strided_slice %19 {offsets = [0, 0, 0], sizes = [1, 8, 8], strides = [1, 1, 1]} : vector<1x8x32xbf16> to vector<1x8x8xbf16>
    %32 = vector.extract_strided_slice %29 {offsets = [0, 0, 0], sizes = [1, 8, 8], strides = [1, 1, 1]} : vector<1x8x32xbf16> to vector<1x8x8xbf16>
    "tpu.trace_start"() <{level = 10 : i32, message = "bqd,bkd->bqk"}> : () -> ()
    %cst_23 = arith.constant dense<0.000000e+00> : vector<1x8x8xf32>
    %33 = tpu.matmul %30, %31, %cst_23 {dimension_numbers = #tpu.dot_dimension_numbers<[2], [2], [1], [1], [0, 0, 0, 1, 1, 1], [0], [0]>} : vector<1x8x8xbf16>, vector<1x8x8xbf16>, vector<1x8x8xf32> -> vector<1x8x8xf32>
    "tpu.trace_stop"() : () -> ()
    %cst_24 = arith.constant dense<0xFF800000> : vector<1x8xf32>
    %34 = vector.multi_reduction <maximumf>, %33, %cst_24 [2] : vector<1x8x8xf32> to vector<1x8xf32>
    %35 = vector.shape_cast %34 : vector<1x8xf32> to vector<1x8x1xf32>
    %36 = vector.broadcast %35 : vector<1x8x1xf32> to vector<1x8x8xf32>
    %37 = arith.subf %33, %36 : vector<1x8x8xf32>
    %38 = math.exp %37 : vector<1x8x8xf32>
    %cst_25 = arith.constant dense<0.000000e+00> : vector<1x8xf32>
    %39 = vector.multi_reduction <add>, %38, %cst_25 [2] : vector<1x8x8xf32> to vector<1x8xf32>
    %40 = vector.shape_cast %39 : vector<1x8xf32> to vector<1x8x1xf32>
    %41 = tpu.reciprocal %40 {approx = true} : vector<1x8x1xf32> -> vector<1x8x1xf32>
    %42 = vector.broadcast %41 : vector<1x8x1xf32> to vector<1x8x8xf32>
    %43 = arith.mulf %38, %42 : vector<1x8x8xf32>
    %44 = arith.truncf %43 : vector<1x8x8xf32> to vector<1x8x8xbf16>
    "tpu.trace_start"() <{level = 10 : i32, message = "bqk,bkd->bqd"}> : () -> ()
    %cst_26 = arith.constant dense<0.000000e+00> : vector<1x8x8xf32>
    %45 = tpu.matmul %44, %32, %cst_26 {dimension_numbers = #tpu.dot_dimension_numbers<[2], [1], [1], [2], [0, 0, 0, 1, 1, 2], [0], [0]>} : vector<1x8x8xbf16>, vector<1x8x8xbf16>, vector<1x8x8xf32> -> vector<1x8x8xf32>
    "tpu.trace_stop"() : () -> ()
    %46 = vector.shape_cast %45 : vector<1x8x8xf32> to vector<8x8xf32>
    %c0_27 = arith.constant 0 : index
    %c0_28 = arith.constant 0 : index
    %47 = vector.load %arg9[%c0_27, %c0_28] : memref<8x32xf32, #tpu.memory_space<vmem>>, vector<8x8xf32>
    tpu.vector_store %arg9[%c0_27, %c0_28], %46 {strides = array<i32>} : memref<8x32xf32, #tpu.memory_space<vmem>>, vector<8x8xf32>,
    %48 = vector.extract_strided_slice %9 {offsets = [0, 0, 8], sizes = [1, 8, 8], strides = [1, 1, 1]} : vector<1x8x32xbf16> to vector<1x8x8xbf16>
    %49 = vector.extract_strided_slice %19 {offsets = [0, 0, 8], sizes = [1, 8, 8], strides = [1, 1, 1]} : vector<1x8x32xbf16> to vector<1x8x8xbf16>
    %50 = vector.extract_strided_slice %29 {offsets = [0, 0, 8], sizes = [1, 8, 8], strides = [1, 1, 1]} : vector<1x8x32xbf16> to vector<1x8x8xbf16>
    "tpu.trace_start"() <{level = 10 : i32, message = "bqd,bkd->bqk"}> : () -> ()
    %cst_29 = arith.constant dense<0.000000e+00> : vector<1x8x8xf32>
    %51 = tpu.matmul %48, %49, %cst_29 {dimension_numbers = #tpu.dot_dimension_numbers<[2], [2], [1], [1], [0, 0, 0, 1, 1, 1], [0], [0]>} : vector<1x8x8xbf16>, vector<1x8x8xbf16>, vector<1x8x8xf32> -> vector<1x8x8xf32>
    "tpu.trace_stop"() : () -> ()
    %cst_30 = arith.constant dense<0xFF800000> : vector<1x8xf32>
    %52 = vector.multi_reduction <maximumf>, %51, %cst_30 [2] : vector<1x8x8xf32> to vector<1x8xf32>
    %53 = vector.shape_cast %52 : vector<1x8xf32> to vector<1x8x1xf32>
    %54 = vector.broadcast %53 : vector<1x8x1xf32> to vector<1x8x8xf32>
    %55 = arith.subf %51, %54 : vector<1x8x8xf32>
    %56 = math.exp %55 : vector<1x8x8xf32>
    %cst_31 = arith.constant dense<0.000000e+00> : vector<1x8xf32>
    %57 = vector.multi_reduction <add>, %56, %cst_31 [2] : vector<1x8x8xf32> to vector<1x8xf32>
    %58 = vector.shape_cast %57 : vector<1x8xf32> to vector<1x8x1xf32>
    %59 = tpu.reciprocal %58 {approx = true} : vector<1x8x1xf32> -> vector<1x8x1xf32>
    %60 = vector.broadcast %59 : vector<1x8x1xf32> to vector<1x8x8xf32>
    %61 = arith.mulf %56, %60 : vector<1x8x8xf32>
    %62 = arith.truncf %61 : vector<1x8x8xf32> to vector<1x8x8xbf16>
    "tpu.trace_start"() <{level = 10 : i32, message = "bqk,bkd->bqd"}> : () -> ()
    %cst_32 = arith.constant dense<0.000000e+00> : vector<1x8x8xf32>
    %63 = tpu.matmul %62, %50, %cst_32 {dimension_numbers = #tpu.dot_dimension_numbers<[2], [1], [1], [2], [0, 0, 0, 1, 1, 2], [0], [0]>} : vector<1x8x8xbf16>, vector<1x8x8xbf16>, vector<1x8x8xf32> -> vector<1x8x8xf32>
    "tpu.trace_stop"() : () -> ()
    %64 = vector.shape_cast %63 : vector<1x8x8xf32> to vector<8x8xf32>
    %c0_33 = arith.constant 0 : index
    %c8 = arith.constant 8 : index
    %65 = vector.load %arg9[%c0_33, %c8] : memref<8x32xf32, #tpu.memory_space<vmem>>, vector<8x8xf32>
    tpu.vector_store %arg9[%c0_33, %c8], %64 {strides = array<i32>} : memref<8x32xf32, #tpu.memory_space<vmem>>, vector<8x8xf32>,
    %66 = vector.extract_strided_slice %9 {offsets = [0, 0, 16], sizes = [1, 8, 8], strides = [1, 1, 1]} : vector<1x8x32xbf16> to vector<1x8x8xbf16>
    %67 = vector.extract_strided_slice %19 {offsets = [0, 0, 16], sizes = [1, 8, 8], strides = [1, 1, 1]} : vector<1x8x32xbf16> to vector<1x8x8xbf16>
    %68 = vector.extract_strided_slice %29 {offsets = [0, 0, 16], sizes = [1, 8, 8], strides = [1, 1, 1]} : vector<1x8x32xbf16> to vector<1x8x8xbf16>
    "tpu.trace_start"() <{level = 10 : i32, message = "bqd,bkd->bqk"}> : () -> ()
    %cst_34 = arith.constant dense<0.000000e+00> : vector<1x8x8xf32>
    %69 = tpu.matmul %66, %67, %cst_34 {dimension_numbers = #tpu.dot_dimension_numbers<[2], [2], [1], [1], [0, 0, 0, 1, 1, 1], [0], [0]>} : vector<1x8x8xbf16>, vector<1x8x8xbf16>, vector<1x8x8xf32> -> vector<1x8x8xf32>
    "tpu.trace_stop"() : () -> ()
    %cst_35 = arith.constant dense<0xFF800000> : vector<1x8xf32>
    %70 = vector.multi_reduction <maximumf>, %69, %cst_35 [2] : vector<1x8x8xf32> to vector<1x8xf32>
    %71 = vector.shape_cast %70 : vector<1x8xf32> to vector<1x8x1xf32>
    %72 = vector.broadcast %71 : vector<1x8x1xf32> to vector<1x8x8xf32>
    %73 = arith.subf %69, %72 : vector<1x8x8xf32>
    %74 = math.exp %73 : vector<1x8x8xf32>
    %cst_36 = arith.constant dense<0.000000e+00> : vector<1x8xf32>
    %75 = vector.multi_reduction <add>, %74, %cst_36 [2] : vector<1x8x8xf32> to vector<1x8xf32>
    %76 = vector.shape_cast %75 : vector<1x8xf32> to vector<1x8x1xf32>
    %77 = tpu.reciprocal %76 {approx = true} : vector<1x8x1xf32> -> vector<1x8x1xf32>
    %78 = vector.broadcast %77 : vector<1x8x1xf32> to vector<1x8x8xf32>
    %79 = arith.mulf %74, %78 : vector<1x8x8xf32>
    %80 = arith.truncf %79 : vector<1x8x8xf32> to vector<1x8x8xbf16>
    "tpu.trace_start"() <{level = 10 : i32, message = "bqk,bkd->bqd"}> : () -> ()
    %cst_37 = arith.constant dense<0.000000e+00> : vector<1x8x8xf32>
    %81 = tpu.matmul %80, %68, %cst_37 {dimension_numbers = #tpu.dot_dimension_numbers<[2], [1], [1], [2], [0, 0, 0, 1, 1, 2], [0], [0]>} : vector<1x8x8xbf16>, vector<1x8x8xbf16>, vector<1x8x8xf32> -> vector<1x8x8xf32>
    "tpu.trace_stop"() : () -> ()
    %82 = vector.shape_cast %81 : vector<1x8x8xf32> to vector<8x8xf32>
    %c0_38 = arith.constant 0 : index
    %c16 = arith.constant 16 : index
    %83 = vector.load %arg9[%c0_38, %c16] : memref<8x32xf32, #tpu.memory_space<vmem>>, vector<8x8xf32>
    tpu.vector_store %arg9[%c0_38, %c16], %82 {strides = array<i32>} : memref<8x32xf32, #tpu.memory_space<vmem>>, vector<8x8xf32>,
    %84 = vector.extract_strided_slice %9 {offsets = [0, 0, 24], sizes = [1, 8, 8], strides = [1, 1, 1]} : vector<1x8x32xbf16> to vector<1x8x8xbf16>
    %85 = vector.extract_strided_slice %19 {offsets = [0, 0, 24], sizes = [1, 8, 8], strides = [1, 1, 1]} : vector<1x8x32xbf16> to vector<1x8x8xbf16>
    %86 = vector.extract_strided_slice %29 {offsets = [0, 0, 24], sizes = [1, 8, 8], strides = [1, 1, 1]} : vector<1x8x32xbf16> to vector<1x8x8xbf16>
    "tpu.trace_start"() <{level = 10 : i32, message = "bqd,bkd->bqk"}> : () -> ()
    %cst_39 = arith.constant dense<0.000000e+00> : vector<1x8x8xf32>
    %87 = tpu.matmul %84, %85, %cst_39 {dimension_numbers = #tpu.dot_dimension_numbers<[2], [2], [1], [1], [0, 0, 0, 1, 1, 1], [0], [0]>} : vector<1x8x8xbf16>, vector<1x8x8xbf16>, vector<1x8x8xf32> -> vector<1x8x8xf32>
    "tpu.trace_stop"() : () -> ()
    %cst_40 = arith.constant dense<0xFF800000> : vector<1x8xf32>
    %88 = vector.multi_reduction <maximumf>, %87, %cst_40 [2] : vector<1x8x8xf32> to vector<1x8xf32>
    %89 = vector.shape_cast %88 : vector<1x8xf32> to vector<1x8x1xf32>
    %90 = vector.broadcast %89 : vector<1x8x1xf32> to vector<1x8x8xf32>
    %91 = arith.subf %87, %90 : vector<1x8x8xf32>
    %92 = math.exp %91 : vector<1x8x8xf32>
    %cst_41 = arith.constant dense<0.000000e+00> : vector<1x8xf32>
    %93 = vector.multi_reduction <add>, %92, %cst_41 [2] : vector<1x8x8xf32> to vector<1x8xf32>
    %94 = vector.shape_cast %93 : vector<1x8xf32> to vector<1x8x1xf32>
    %95 = tpu.reciprocal %94 {approx = true} : vector<1x8x1xf32> -> vector<1x8x1xf32>
    %96 = vector.broadcast %95 : vector<1x8x1xf32> to vector<1x8x8xf32>
    %97 = arith.mulf %92, %96 : vector<1x8x8xf32>
    %98 = arith.truncf %97 : vector<1x8x8xf32> to vector<1x8x8xbf16>
    "tpu.trace_start"() <{level = 10 : i32, message = "bqk,bkd->bqd"}> : () -> ()
    %cst_42 = arith.constant dense<0.000000e+00> : vector<1x8x8xf32>
    %99 = tpu.matmul %98, %86, %cst_42 {dimension_numbers = #tpu.dot_dimension_numbers<[2], [1], [1], [2], [0, 0, 0, 1, 1, 2], [0], [0]>} : vector<1x8x8xbf16>, vector<1x8x8xbf16>, vector<1x8x8xf32> -> vector<1x8x8xf32>
    "tpu.trace_stop"() : () -> ()
    %100 = vector.shape_cast %99 : vector<1x8x8xf32> to vector<8x8xf32>
    %c0_43 = arith.constant 0 : index
    %c24 = arith.constant 24 : index
    %101 = vector.load %arg9[%c0_43, %c24] : memref<8x32xf32, #tpu.memory_space<vmem>>, vector<8x8xf32>
    tpu.vector_store %arg9[%c0_43, %c24], %100 {strides = array<i32>} : memref<8x32xf32, #tpu.memory_space<vmem>>, vector<8x8xf32>,
    %c0_44 = arith.constant 0 : index
    %c0_45 = arith.constant 0 : index
    %102 = vector.load %arg9[%c0_44, %c0_45] : memref<8x32xf32, #tpu.memory_space<vmem>>, vector<8x32xf32>
    %103 = arith.truncf %102 : vector<8x32xf32> to vector<8x32xbf16>
    %c0_46 = arith.constant 0 : index
    %c0_47 = arith.constant 0 : index
    %104 = vector.load %arg6[%c0_46, %c0_47] : memref<32x32xbf16, #tpu.memory_space<vmem>>, vector<32x32xbf16>
    %cst_48 = arith.constant dense<0.000000e+00> : vector<8x32xf32>
    %105 = tpu.matmul %103, %104, %cst_48 {dimension_numbers = #tpu.dot_dimension_numbers<[1], [0], [0], [1], [0, 0, 1, 1], [], []>} : vector<8x32xbf16>, vector<32x32xbf16>, vector<8x32xf32> -> vector<8x32xf32>
    %c0_49 = arith.constant 0 : index
    %c0_50 = arith.constant 0 : index
    %106 = vector.load %arg7[%c0_49, %c0_50] : memref<1x32xf32, #tpu.memory_space<vmem>>, vector<1x32xf32>
    %107 = vector.broadcast %106 : vector<1x32xf32> to vector<8x32xf32>
    %108 = arith.addf %105, %107 : vector<8x32xf32>
    %c0_51 = arith.constant 0 : index
    %c0_52 = arith.constant 0 : index
    %109 = vector.load %arg8[%c0_51, %c0_52] : memref<8x32xf32, #tpu.memory_space<vmem>>, vector<8x32xf32>
    tpu.vector_store %arg8[%c0_51, %c0_52], %108 {strides = array<i32>} : memref<8x32xf32, #tpu.memory_space<vmem>>, vector<8x32xf32>,
    return
  }
  func.func @transform_0(%arg0: i32) -> (i32, i32) {
    %c0_i32 = arith.constant 0 : i32
    %c0_i32_0 = arith.constant 0 : i32
    return %arg0, %c0_i32 : i32, i32
  }
  func.func @transform_1(%arg0: i32) -> (i32, i32) {
    %c0_i32 = arith.constant 0 : i32
    %c0_i32_0 = arith.constant 0 : i32
    return %arg0, %c0_i32 : i32, i32
  }
  func.func @transform_2(%arg0: i32) -> (i32, i32) {
    %c0_i32 = arith.constant 0 : i32
    %c0_i32_0 = arith.constant 0 : i32
    return %arg0, %c0_i32 : i32, i32
  }
  func.func @transform_3(%arg0: i32) -> (i32, i32, i32) {
    %c0_i32 = arith.constant 0 : i32
    %c0_i32_0 = arith.constant 0 : i32
    %c0_i32_1 = arith.constant 0 : i32
    %c0_i32_2 = arith.constant 0 : i32
    return %c0_i32, %c0_i32_0, %c0_i32_1 : i32, i32, i32
  }
  func.func @transform_4(%arg0: i32) -> (i32, i32, i32) {
    %c0_i32 = arith.constant 0 : i32
    %c0_i32_0 = arith.constant 0 : i32
    %c0_i32_1 = arith.constant 0 : i32
    %c0_i32_2 = arith.constant 0 : i32
    return %c0_i32, %c0_i32_0, %c0_i32_1 : i32, i32, i32
  }
  func.func @transform_5(%arg0: i32) -> (i32, i32) {
    %c0_i32 = arith.constant 0 : i32
    %c0_i32_0 = arith.constant 0 : i32
    %c0_i32_1 = arith.constant 0 : i32
    return %c0_i32, %c0_i32_0 : i32, i32
  }
  func.func @transform_6(%arg0: i32) -> (i32, i32) {
    %c0_i32 = arith.constant 0 : i32
    %c0_i32_0 = arith.constant 0 : i32
    %c0_i32_1 = arith.constant 0 : i32
    return %c0_i32, %c0_i32_0 : i32, i32
  }
  func.func @transform_7(%arg0: i32) -> (i32, i32) {
    %c0_i32 = arith.constant 0 : i32
    %c0_i32_0 = arith.constant 0 : i32
    return %arg0, %c0_i32 : i32, i32
  }
}

</mosaic_0001>

<llo_original>
// kernel: tpu_custom_call.1
$region0: #{tpu_custom_call.1}
  #allocation0 [shape = 'u32[]', space=smem, size = 0x4, offset = 0x4, fixed_abs, tag = 'smem constant byte address 0x4 - core index']
  #allocation1 [shape = 'u32[72,128]{1,0:T(1,128)}', space=vmem, size = 0x9000, scoped, tag = 'internal scratch']
  #allocation2 [shape = 'f32[8,32]{1,0:T(8,128)}', space=vmem, size = 0x1000, scoped, tag = 'scratch operand']
  %s0 = inlined_call_operand.hbm [shape: bf16[16,32], index: 0, kind: input, shape index: {}]
  %s1 = inlined_call_operand.hbm [shape: bf16[16,32], index: 1, kind: input, shape index: {}]
  %s2 = inlined_call_operand.hbm [shape: bf16[16,32], index: 2, kind: input, shape index: {}]
  %s3 = inlined_call_operand.hbm [shape: bf16[3,32,32], index: 3, kind: input, shape index: {}]
  %s4 = inlined_call_operand.vmem [shape: f32[3,1,32], index: 4, kind: input, shape index: {}]
  %s5 = inlined_call_operand.hbm [shape: bf16[32,32], index: 5, kind: input, shape index: {}]
  %s6 = inlined_call_operand.vmem [shape: f32[1,32], index: 6, kind: input, shape index: {}]
  %s7 = inlined_call_operand.hbm [shape: f32[16,32], index: 7, kind: output, shape index: {}]
  %s8 = sld [smem:[#allocation0]]
  $region81: #{tpu_custom_call.1} parent=0
    _
  %s10 = ssub.s32 1, %s8
  %s11 = scalar_select 0, %s10, %s8
  $region1: #{tpu_custom_call.1} parent=0
    #allocation3 [shape = 'u8[4096]{0}', space=vmem, size = 0x1000, scoped, tag = 'input window, operand 0']
    #allocation4 [shape = 's32[2]{0}', space=sflag, size = 0x8, scoped, tag = 'scoped memory for tpu_custom_call.1']
    #allocation5 [shape = 's32[2]{0}', space=sflag, size = 0x8, scoped, tag = 'scoped memory for tpu_custom_call.1']
    #allocation6 [shape = 'u8[4096]{0}', space=vmem, size = 0x1000, scoped, tag = 'input window, operand 1']
    #allocation7 [shape = 's32[2]{0}', space=sflag, size = 0x8, scoped, tag = 'scoped memory for tpu_custom_call.1']
    #allocation8 [shape = 'u8[4096]{0}', space=vmem, size = 0x1000, scoped, tag = 'input window, operand 2']
    #allocation9 [shape = 'u8[24576]{0}', space=vmem, size = 0x6000, scoped, tag = 'input window, operand 3, single buffered']
    #allocation10 [shape = 's32[1]{0}', space=sflag, size = 0x4, scoped, tag = 'scoped memory for tpu_custom_call.1']
    #allocation11 [shape = 'u8[8192]{0}', space=vmem, size = 0x2000, scoped, tag = 'input window, operand 5, single buffered']
    #allocation12 [shape = 'u8[8192]{0}', space=vmem, size = 0x2000, scoped, tag = 'output window, operand 0']
    %12 = vsyncpa [#allocation4], 0
    %s13 = scalar_lea.sflag [#allocation4], 1
    %14 = vsyncpa %s13, 0
    %15 = vsyncpa [#allocation7], 0
    %s16 = scalar_lea.sflag [#allocation7], 1
    %17 = vsyncpa %s16, 0
    %18 = vsyncpa [#allocation10], 0
    %19 = vsyncpa [#allocation5], 0
    %s20 = scalar_lea.sflag [#allocation5], 1
    %21 = vsyncpa %s20, 0
    loop: start=0, step=1, limit=4
    $region2: #{tpu_custom_call.1} parent=1 // loop_pre_header
      _
    $region3: #{tpu_custom_call.1} parent=1 // loop_header
      %s23 = sphi 0, %s27
      %p24 = scmp.ge.s32.totalorder %s23, 4
      %s33 = sphi 0, %s35
      %s36 = sphi 0, %s33
      %s37 = sphi 0, %s36
      %s53 = sphi 0, %s37
      %s59 = sphi 0, %s61
      %s62 = sphi 0, %s59
      %s63 = sphi 0, %s62
      %s79 = sphi 0, %s63
      %s85 = sphi 0, %s87
      %s88 = sphi 0, %s85
      %s89 = sphi 0, %s88
      %s105 = sphi 0, %s89
      %s109 = sphi 0, %s109
      %s111 = sphi 0, %s109
      %s112 = sphi 0, %s111
      %s126 = sphi 0, %s112
      %s130 = sphi 0, %s130
      %s132 = sphi 0, %s130
      %s133 = sphi 0, %s132
      %s147 = sphi 0, %s133
      %s151 = sphi 0, %s151
      %s153 = sphi 0, %s151
      %s154 = sphi 0, %s153
      %s168 = sphi 0, %s154
      %s172 = sphi 0, %s172
      %s174 = sphi 0, %s172
      %s175 = sphi 0, %s174
      %s189 = sphi 0, %s175
      %s195 = sphi 0, %s197
      %s198 = sphi 0, %s195
      %s199 = sphi 0, %s198
      %s215 = sphi 0, %s199
    $region4: #{tpu_custom_call.1} parent=1 // loop_header_branch
      %26 = sbr.rel (%p24) target = $region8
    $region5: #{tpu_custom_call.1} parent=1 // loop_body
      %s28 = ssub.s32 %s23, 1
      %s29 = ssub.s32 %s23, 2
      %s30 = sadd.s32 %s23, 1
      %s31 = ssub.s32 %s23, %s30
      %p32 = scmp.eq.s32.totalorder %s31, 0
      %s34 = sadd.s32 %s33, 1
      %s35 = scalar_select %p32, %s33, %s34
      %p38 = pneg %p32
      %p39 = scmp.eq.s32.totalorder %s23, 1
      %p40 = por %p38, %p39
      %p41 = scmp.ne.s32.totalorder %s33, %s36
      %p42 = scmp.eq.s32.totalorder %s23, 0
      %p43 = por %p41, %p42
      %p44 = scmp.ne.s32.totalorder %s33, %s36
      %p45 = scmp.eq.s32.totalorder %s28, 1
      %p46 = por %p44, %p45
      %p47 = scmp.ne.s32.totalorder %s36, %s37
      %p48 = scmp.eq.s32.totalorder %s28, 0
      %p49 = por %p47, %p48
      %p50 = scmp.ne.s32.totalorder %s36, %s37
      %p51 = scmp.eq.s32.totalorder %s29, 1
      %p52 = por %p50, %p51
      %p54 = scmp.ne.s32.totalorder %s37, %s53
      %p55 = scmp.eq.s32.totalorder %s29, 0
      %p56 = por %p54, %p55
      %s57 = ssub.s32 %s23, %s30
      %p58 = scmp.eq.s32.totalorder %s57, 0
      %s60 = sadd.s32 %s59, 1
      %s61 = scalar_select %p58, %s59, %s60
      %p64 = pneg %p58
      %p65 = scmp.eq.s32.totalorder %s23, 1
      %p66 = por %p64, %p65
      %p67 = scmp.ne.s32.totalorder %s59, %s62
      %p68 = scmp.eq.s32.totalorder %s23, 0
      %p69 = por %p67, %p68
      %p70 = scmp.ne.s32.totalorder %s59, %s62
      %p71 = scmp.eq.s32.totalorder %s28, 1
      %p72 = por %p70, %p71
      %p73 = scmp.ne.s32.totalorder %s62, %s63
      %p74 = scmp.eq.s32.totalorder %s28, 0
      %p75 = por %p73, %p74
      %p76 = scmp.ne.s32.totalorder %s62, %s63
      %p77 = scmp.eq.s32.totalorder %s29, 1
      %p78 = por %p76, %p77
      %p80 = scmp.ne.s32.totalorder %s63, %s79
      %p81 = scmp.eq.s32.totalorder %s29, 0
      %p82 = por %p80, %p81
      %s83 = ssub.s32 %s23, %s30
      %p84 = scmp.eq.s32.totalorder %s83, 0
      %s86 = sadd.s32 %s85, 1
      %s87 = scalar_select %p84, %s85, %s86
      %p90 = pneg %p84
      %p91 = scmp.eq.s32.totalorder %s23, 1
      %p92 = por %p90, %p91
      %p93 = scmp.ne.s32.totalorder %s85, %s88
      %p94 = scmp.eq.s32.totalorder %s23, 0
      %p95 = por %p93, %p94
      %p96 = scmp.ne.s32.totalorder %s85, %s88
      %p97 = scmp.eq.s32.totalorder %s28, 1
      %p98 = por %p96, %p97
      %p99 = scmp.ne.s32.totalorder %s88, %s89
      %p100 = scmp.eq.s32.totalorder %s28, 0
      %p101 = por %p99, %p100
      %p102 = scmp.ne.s32.totalorder %s88, %s89
      %p103 = scmp.eq.s32.totalorder %s29, 1
      %p104 = por %p102, %p103
      %p106 = scmp.ne.s32.totalorder %s89, %s105
      %p107 = scmp.eq.s32.totalorder %s29, 0
      %p108 = por %p106, %p107
      %s110 = sadd.s32 %s109, 1
      %p113 = scmp.eq.s32.totalorder %s23, 1
      %p114 = scmp.ne.s32.totalorder %s109, %s111
      %p115 = scmp.eq.s32.totalorder %s23, 0
      %p116 = por %p114, %p115
      %p117 = scmp.ne.s32.totalorder %s109, %s111
      %p118 = scmp.eq.s32.totalorder %s28, 1
      %p119 = por %p117, %p118
      %p120 = scmp.ne.s32.totalorder %s111, %s112
      %p121 = scmp.eq.s32.totalorder %s28, 0
      %p122 = por %p120, %p121
      %p123 = scmp.ne.s32.totalorder %s111, %s112
      %p124 = scmp.eq.s32.totalorder %s29, 1
      %p125 = por %p123, %p124
      %p127 = scmp.ne.s32.totalorder %s112, %s126
      %p128 = scmp.eq.s32.totalorder %s29, 0
      %p129 = por %p127, %p128
      %s131 = sadd.s32 %s130, 1
      %p134 = scmp.eq.s32.totalorder %s23, 1
      %p135 = scmp.ne.s32.totalorder %s130, %s132
      %p136 = scmp.eq.s32.totalorder %s23, 0
      %p137 = por %p135, %p136
      %p138 = scmp.ne.s32.totalorder %s130, %s132
      %p139 = scmp.eq.s32.totalorder %s28, 1
      %p140 = por %p138, %p139
      %p141 = scmp.ne.s32.totalorder %s132, %s133
      %p142 = scmp.eq.s32.totalorder %s28, 0
      %p143 = por %p141, %p142
      %p144 = scmp.ne.s32.totalorder %s132, %s133
      %p145 = scmp.eq.s32.totalorder %s29, 1
      %p146 = por %p144, %p145
      %p148 = scmp.ne.s32.totalorder %s133, %s147
      %p149 = scmp.eq.s32.totalorder %s29, 0
      %p150 = por %p148, %p149
      %s152 = sadd.s32 %s151, 1
      %p155 = scmp.eq.s32.totalorder %s23, 1
      %p156 = scmp.ne.s32.totalorder %s151, %s153
      %p157 = scmp.eq.s32.totalorder %s23, 0
      %p158 = por %p156, %p157
      %p159 = scmp.ne.s32.totalorder %s151, %s153
      %p160 = scmp.eq.s32.totalorder %s28, 1
      %p161 = por %p159, %p160
      %p162 = scmp.ne.s32.totalorder %s153, %s154
      %p163 = scmp.eq.s32.totalorder %s28, 0
      %p164 = por %p162, %p163
      %p165 = scmp.ne.s32.totalorder %s153, %s154
      %p166 = scmp.eq.s32.totalorder %s29, 1
      %p167 = por %p165, %p166
      %p169 = scmp.ne.s32.totalorder %s154, %s168
      %p170 = scmp.eq.s32.totalorder %s29, 0
      %p171 = por %p169, %p170
      %s173 = sadd.s32 %s172, 1
      %p176 = scmp.eq.s32.totalorder %s23, 1
      %p177 = scmp.ne.s32.totalorder %s172, %s174
      %p178 = scmp.eq.s32.totalorder %s23, 0
      %p179 = por %p177, %p178
      %p180 = scmp.ne.s32.totalorder %s172, %s174
      %p181 = scmp.eq.s32.totalorder %s28, 1
      %p182 = por %p180, %p181
      %p183 = scmp.ne.s32.totalorder %s174, %s175
      %p184 = scmp.eq.s32.totalorder %s28, 0
      %p185 = por %p183, %p184
      %p186 = scmp.ne.s32.totalorder %s174, %s175
      %p187 = scmp.eq.s32.totalorder %s29, 1
      %p188 = por %p186, %p187
      %p190 = scmp.ne.s32.totalorder %s175, %s189
      %p191 = scmp.eq.s32.totalorder %s29, 0
      %p192 = por %p190, %p191
      %s193 = ssub.s32 %s23, %s30
      %p194 = scmp.eq.s32.totalorder %s193, 0
      %s196 = sadd.s32 %s195, 1
      %s197 = scalar_select %p194, %s195, %s196
      %p200 = pneg %p194
      %p201 = scmp.eq.s32.totalorder %s23, 1
      %p202 = por %p200, %p201
      %p203 = scmp.ne.s32.totalorder %s195, %s198
      %p204 = scmp.eq.s32.totalorder %s23, 0
      %p205 = por %p203, %p204
      %p206 = scmp.ne.s32.totalorder %s195, %s198
      %p207 = scmp.eq.s32.totalorder %s28, 1
      %p208 = por %p206, %p207
      %p209 = scmp.ne.s32.totalorder %s198, %s199
      %p210 = scmp.eq.s32.totalorder %s28, 0
      %p211 = por %p209, %p210
      %p212 = scmp.ne.s32.totalorder %s198, %s199
      %p213 = scmp.eq.s32.totalorder %s29, 1
      %p214 = por %p212, %p213
      %p216 = scmp.ne.s32.totalorder %s199, %s215
      %p217 = scmp.eq.s32.totalorder %s29, 0
      %p218 = por %p216, %p217
      %p219 = scmp.le.s32.totalorder 1, %s23
      %p220 = scmp.lt.s32.totalorder %s23, 3
      %p221 = pnand %p219, %p220
      %p222 = pneg %p221
      // Predicated region
      $region9: #{tpu_custom_call.1} parent=5 // pred_check
        _
      $region10: #{tpu_custom_call.1} parent=5 // pred_check_branch
        %224 = sbr.rel (%p221) target = $region12
      $region11: #{tpu_custom_call.1} parent=5 // pred_region
        %s225 = ssub.s32 %s23, 1
        // Predicated region
        $region13: #{tpu_custom_call.1} parent=11 // pred_check
          %p226 = pneg %p122
        $region14: #{tpu_custom_call.1} parent=11 // pred_check_branch
          %228 = sbr.rel (%p226) target = $region16
        $region15: #{tpu_custom_call.1} parent=11 // pred_region
          %230 = vsyncadd [#allocation10], 0
          %s231 = sshll.u32 %s3, 4
          %s232 = int_to_ptr.hbm [resolvable:$true] %s231
          %s233 = sshll.u32 [#allocation9], 4
          %s234 = int_to_ptr.vmem [resolvable:$true] %s233
          %239 = dma.hbm_to_vmem [thread:$0]  %s232, 768, %s234, [#allocation10], 64, 64, 4
        $region16: #{tpu_custom_call.1} parent=11 // pred_fallthru
          _
        // Predicated region
        $region17: #{tpu_custom_call.1} parent=11 // pred_check
          %p240 = pneg %p143
        $region18: #{tpu_custom_call.1} parent=11 // pred_check_branch
          %242 = sbr.rel (%p240) target = $region20
        $region19: #{tpu_custom_call.1} parent=11 // pred_region
          _
        $region20: #{tpu_custom_call.1} parent=11 // pred_fallthru
          _
        // Predicated region
        $region21: #{tpu_custom_call.1} parent=11 // pred_check
          %p243 = pneg %p164
        $region22: #{tpu_custom_call.1} parent=11 // pred_check_branch
          %245 = sbr.rel (%p243) target = $region24
        $region23: #{tpu_custom_call.1} parent=11 // pred_region
          %247 = vsyncadd [#allocation10], 0
          %s248 = sshll.u32 %s5, 4
          %s249 = int_to_ptr.hbm [resolvable:$true] %s248
          %s250 = sshll.u32 [#allocation11], 4
          %s251 = int_to_ptr.vmem [resolvable:$true] %s250
          %256 = dma.hbm_to_vmem [thread:$0]  %s249, 256, %s251, [#allocation10], 64, 64, 4
        $region24: #{tpu_custom_call.1} parent=11 // pred_fallthru
          _
        // Predicated region
        $region25: #{tpu_custom_call.1} parent=11 // pred_check
          %p257 = pneg %p185
        $region26: #{tpu_custom_call.1} parent=11 // pred_check_branch
          %259 = sbr.rel (%p257) target = $region28
        $region27: #{tpu_custom_call.1} parent=11 // pred_region
          _
        $region28: #{tpu_custom_call.1} parent=11 // pred_fallthru
          _
      $region12: #{tpu_custom_call.1} parent=5 // pred_fallthru
        _
      %p260 = scmp.lt.s32.totalorder %s23, 2
      // Predicated region
      $region29: #{tpu_custom_call.1} parent=5 // pred_check
        %p261 = pneg %p260
      $region30: #{tpu_custom_call.1} parent=5 // pred_check_branch
        %263 = sbr.rel (%p261) target = $region32
      $region31: #{tpu_custom_call.1} parent=5 // pred_region
        // Predicated region
        $region33: #{tpu_custom_call.1} parent=31 // pred_check
          %p264 = pneg %p43
        $region34: #{tpu_custom_call.1} parent=31 // pred_check_branch
          %266 = sbr.rel (%p264) target = $region36
        $region35: #{tpu_custom_call.1} parent=31 // pred_region
          %s267 = sand.u32 %s33, 1
          %s268 = scalar_lea.sflag [#allocation4], %s267
          %s269 = sand.u32 %s33, 1
          %s270 = smul.addr %s269, 4
          %s271 = scalar_lea.vmem [#allocation3], %s270
          %273 = vsyncadd %s268, 0
          %s274 = smul.addr %s23, 4
          %s275 = scalar_lea.hbm %s0, %s274
          %s277 = sshll.u32 %s275, 4
          %s278 = int_to_ptr.hbm [resolvable:$true] %s277
          %s279 = sshll.u32 %s271, 4
          %s280 = int_to_ptr.vmem [resolvable:$true] %s279
          %282 = dma.hbm_to_vmem [thread:$0]  %s278, 64, %s280, %s268
        $region36: #{tpu_custom_call.1} parent=31 // pred_fallthru
          _
        // Predicated region
        $region37: #{tpu_custom_call.1} parent=31 // pred_check
          %p283 = pneg %p69
        $region38: #{tpu_custom_call.1} parent=31 // pred_check_branch
          %285 = sbr.rel (%p283) target = $region40
        $region39: #{tpu_custom_call.1} parent=31 // pred_region
          %s286 = sand.u32 %s23, 1
          %s287 = scalar_lea.sflag [#allocation7], %s286
          %s288 = sand.u32 %s59, 1
          %s289 = smul.addr %s288, 4
          %s290 = scalar_lea.vmem [#allocation6], %s289
          %292 = vsyncadd %s287, 0
          %s293 = smul.addr %s23, 4
          %s294 = scalar_lea.hbm %s1, %s293
          %s296 = sshll.u32 %s294, 4
          %s297 = int_to_ptr.hbm [resolvable:$true] %s296
          %s298 = sshll.u32 %s290, 4
          %s299 = int_to_ptr.vmem [resolvable:$true] %s298
          %301 = dma.hbm_to_vmem [thread:$0]  %s297, 64, %s299, %s287
        $region40: #{tpu_custom_call.1} parent=31 // pred_fallthru
          _
        // Predicated region
        $region41: #{tpu_custom_call.1} parent=31 // pred_check
          %p302 = pneg %p95
        $region42: #{tpu_custom_call.1} parent=31 // pred_check_branch
          %304 = sbr.rel (%p302) target = $region44
        $region43: #{tpu_custom_call.1} parent=31 // pred_region
          %s305 = sand.u32 %s23, 1
          %s306 = scalar_lea.sflag [#allocation7], %s305
          %s307 = sand.u32 %s85, 1
          %s308 = smul.addr %s307, 4
          %s309 = scalar_lea.vmem [#allocation8], %s308
          %311 = vsyncadd %s306, 0
          %s312 = smul.addr %s23, 4
          %s313 = scalar_lea.hbm %s2, %s312
          %s315 = sshll.u32 %s313, 4
          %s316 = int_to_ptr.hbm [resolvable:$true] %s315
          %s317 = sshll.u32 %s309, 4
          %s318 = int_to_ptr.vmem [resolvable:$true] %s317
          %320 = dma.hbm_to_vmem [thread:$0]  %s316, 64, %s318, %s306
        $region44: #{tpu_custom_call.1} parent=31 // pred_fallthru
          _
      $region32: #{tpu_custom_call.1} parent=5 // pred_fallthru
        _
      %p321 = scmp.le.s32.totalorder 1, %s23
      %p322 = scmp.lt.s32.totalorder %s23, 3
      %p323 = pnand %p321, %p322
      %p324 = pneg %p323
      // Predicated region
      $region45: #{tpu_custom_call.1} parent=5 // pred_check
        _
      $region46: #{tpu_custom_call.1} parent=5 // pred_check_branch
        %326 = sbr.rel (%p323) target = $region48
      $region47: #{tpu_custom_call.1} parent=5 // pred_region
        %s327 = ssub.s32 %s23, 1
        %s328 = sand.u32 %s36, 1
        %s329 = scalar_lea.sflag [#allocation4], %s328
        %s330 = sand.u32 %s36, 1
        %s331 = smul.addr %s330, 4
        %s332 = scalar_lea.vmem [#allocation3], %s331
        // Predicated region
        $region49: #{tpu_custom_call.1} parent=47 // pred_check
          %p333 = pneg %p49
        $region50: #{tpu_custom_call.1} parent=47 // pred_check_branch
          %335 = sbr.rel (%p333) target = $region52
        $region51: #{tpu_custom_call.1} parent=47 // pred_region
          %337 = dma.done %s329, 64
        $region52: #{tpu_custom_call.1} parent=47 // pred_fallthru
          _
        %s338 = sand.u32 %s28, 1
        %s339 = scalar_lea.sflag [#allocation7], %s338
        %s340 = sand.u32 %s62, 1
        %s341 = smul.addr %s340, 4
        %s342 = scalar_lea.vmem [#allocation6], %s341
        // Predicated region
        $region53: #{tpu_custom_call.1} parent=47 // pred_check
          %p343 = pneg %p75
        $region54: #{tpu_custom_call.1} parent=47 // pred_check_branch
          %345 = sbr.rel (%p343) target = $region56
        $region55: #{tpu_custom_call.1} parent=47 // pred_region
          %347 = dma.done %s339, 64
        $region56: #{tpu_custom_call.1} parent=47 // pred_fallthru
          _
        %s348 = sand.u32 %s28, 1
        %s349 = scalar_lea.sflag [#allocation7], %s348
        %s350 = sand.u32 %s88, 1
        %s351 = smul.addr %s350, 4
        %s352 = scalar_lea.vmem [#allocation8], %s351
        // Predicated region
        $region57: #{tpu_custom_call.1} parent=47 // pred_check
          %p353 = pneg %p101
        $region58: #{tpu_custom_call.1} parent=47 // pred_check_branch
          %355 = sbr.rel (%p353) target = $region60
        $region59: #{tpu_custom_call.1} parent=47 // pred_region
          %357 = dma.done %s349, 64
        $region60: #{tpu_custom_call.1} parent=47 // pred_fallthru
          _
        // Predicated region
        $region61: #{tpu_custom_call.1} parent=47 // pred_check
          %p358 = pneg %p122
        $region62: #{tpu_custom_call.1} parent=47 // pred_check_branch
          %360 = sbr.rel (%p358) target = $region64
        $region63: #{tpu_custom_call.1} parent=47 // pred_region
          %362 = dma.done [#allocation10], 768
        $region64: #{tpu_custom_call.1} parent=47 // pred_fallthru
          _
        // Predicated region
        $region65: #{tpu_custom_call.1} parent=47 // pred_check
          %p363 = pneg %p164
        $region66: #{tpu_custom_call.1} parent=47 // pred_check_branch
          %365 = sbr.rel (%p363) target = $region68
        $region67: #{tpu_custom_call.1} parent=47 // pred_region
          %367 = dma.done [#allocation10], 256
        $region68: #{tpu_custom_call.1} parent=47 // pred_fallthru
          _
        %s368 = sand.u32 %s36, 1
        %s369 = scalar_lea.sflag [#allocation4], %s368
        %s370 = sand.u32 %s36, 1
        %s371 = smul.addr %s370, 4
        %s372 = scalar_lea.vmem [#allocation3], %s371
        %p373 = pneg %p49
        %p374 = pneg %p46
        %s375 = sand.u32 %s28, 1
        %s376 = scalar_lea.sflag [#allocation7], %s375
        %s377 = sand.u32 %s62, 1
        %s378 = smul.addr %s377, 4
        %s379 = scalar_lea.vmem [#allocation6], %s378
        %p380 = pneg %p75
        %p381 = pneg %p72
        %s382 = sand.u32 %s28, 1
        %s383 = scalar_lea.sflag [#allocation7], %s382
        %s384 = sand.u32 %s88, 1
        %s385 = smul.addr %s384, 4
        %s386 = scalar_lea.vmem [#allocation8], %s385
        %p387 = pneg %p101
        %p388 = pneg %p98
        %p389 = pneg %p122
        %p390 = pneg %p119
        %p391 = pneg %p143
        %p392 = pneg %p140
        %p393 = pneg %p164
        %p394 = pneg %p161
        %p395 = pneg %p185
        %p396 = pneg %p182
        %p397 = pneg %p211
        %p398 = pneg %p208
        %s399 = sand.u32 %s198, 1
        %s400 = scalar_lea.sflag [#allocation5], %s399
        %s401 = sand.u32 %s198, 1
        %s402 = smul.addr %s401, 8
        %s403 = scalar_lea.vmem [#allocation12], %s402
        %v405 = vld [vmem:[%s332] sm:$0xf]
        %v406 = vld [vmem:[#allocation9] sm:$0xf]
        %v407 = vld [vmem:[#allocation9 + $0x4] sm:$0xf]
        %v408 = vld [vmem:[#allocation9 + $0x8] sm:$0xf]
        %v409 = vld [vmem:[#allocation9 + $0xc] sm:$0xf]
        %v410 = vld [vmem:[%s4] sm:$0x1]
        %v412 = vperm.slane %v410, 0
        %v418 = vunpack.c.l.b16 %v406
        %v419 = vunpack.c.l.b16 %v407
        %v420 = vunpack.c.l.b16 %v408
        %v421 = vunpack.c.l.b16 %v409
        %v422 = vpack.c.b16 %v419, %v418
        %v423 = vpack.c.b16 %v421, %v420
        %vm426 = vcmask 261120
        %v428 = vsel %vm426, %v405, 0
        %430 = vmatpush.bf16.msra.mxu0 0
        %431 = vmatpush.bf16.msra.mxu0 0
        %432 = vmatpush.bf16.msra.mxu0 0
        %433 = vmatpush.bf16.msra.mxu0 0
        %434 = vmatpush.bf16.msra.mxu0 0
        %435 = vmatpush.bf16.msra.mxu0 0
        %436 = vmatpush.bf16.msra.mxu0 %v423
        %437 = vmatpush.bf16.msra.mxu0 %v422
        %438 = vmatmul.bf16.gmra.mxu0 %v428
        %v439 = vpop.f32.mrf.mxu0
        %v440 = vadd.f32 %v412, %v439
        %v441 = vpop.f32.mrf.mxu0
        %442 = vdwg.mxu0
        %v443 = vpack.c.bf16 %v440, %v440
        %v444 = vld [vmem:[%s342] sm:$0xf]
        %s445 = scalar_lea.vmem [#allocation9], 16
        %v446 = vld [vmem:[%s445] sm:$0xf]
        %v447 = vld [vmem:[%s445 + $0x4] sm:$0xf]
        %v448 = vld [vmem:[%s445 + $0x8] sm:$0xf]
        %v449 = vld [vmem:[%s445 + $0xc] sm:$0xf]
        %s450 = scalar_lea.vmem %s4, 1
        %v451 = vld [vmem:[%s450] sm:$0x1]
        %v453 = vperm.slane %v451, 0
        %v459 = vunpack.c.l.b16 %v446
        %v460 = vunpack.c.l.b16 %v447
        %v461 = vunpack.c.l.b16 %v448
        %v462 = vunpack.c.l.b16 %v449
        %v463 = vpack.c.b16 %v460, %v459
        %v464 = vpack.c.b16 %v462, %v461
        %v468 = vsel %vm426, %v444, 0
        %470 = vmatpush.bf16.msra.mxu0 0
        %471 = vmatpush.bf16.msra.mxu0 0
        %472 = vmatpush.bf16.msra.mxu0 0
        %473 = vmatpush.bf16.msra.mxu0 0
        %474 = vmatpush.bf16.msra.mxu0 0
        %475 = vmatpush.bf16.msra.mxu0 0
        %476 = vmatpush.bf16.msra.mxu0 %v464
        %477 = vmatpush.bf16.msra.mxu0 %v463
        %478 = vmatmul.bf16.gmra.mxu0 %v468
        %v479 = vpop.f32.mrf.mxu0
        %v480 = vadd.f32 %v453, %v479
        %v481 = vpop.f32.mrf.mxu0
        %482 = vdwg.mxu0
        %v483 = vpack.c.bf16 %v480, %v480
        %v484 = vld [vmem:[%s352] sm:$0xf]
        %s485 = scalar_lea.vmem [#allocation9], 32
        %v486 = vld [vmem:[%s485] sm:$0xf]
        %v487 = vld [vmem:[%s485 + $0x4] sm:$0xf]
        %v488 = vld [vmem:[%s485 + $0x8] sm:$0xf]
        %v489 = vld [vmem:[%s485 + $0xc] sm:$0xf]
        %s490 = scalar_lea.vmem %s4, 2
        %v491 = vld [vmem:[%s490] sm:$0x1]
        %v493 = vperm.slane %v491, 0
        %v499 = vunpack.c.l.b16 %v486
        %v500 = vunpack.c.l.b16 %v487
        %v501 = vunpack.c.l.b16 %v488
        %v502 = vunpack.c.l.b16 %v489
        %v503 = vpack.c.b16 %v500, %v499
        %v504 = vpack.c.b16 %v502, %v501
        %v508 = vsel %vm426, %v484, 0
        %510 = vmatpush.bf16.msra.mxu0 0
        %511 = vmatpush.bf16.msra.mxu0 0
        %512 = vmatpush.bf16.msra.mxu0 0
        %513 = vmatpush.bf16.msra.mxu0 0
        %514 = vmatpush.bf16.msra.mxu0 0
        %515 = vmatpush.bf16.msra.mxu0 0
        %516 = vmatpush.bf16.msra.mxu0 %v504
        %517 = vmatpush.bf16.msra.mxu0 %v503
        %518 = vmatmul.bf16.gmra.mxu0 %v508
        %v519 = vpop.f32.mrf.mxu0
        %v520 = vadd.f32 %v493, %v519
        %v521 = vpop.f32.mrf.mxu0
        %522 = vdwg.mxu0
        %v523 = vpack.c.bf16 %v520, %v520
        %vm524 = vcmask 64512
        %v526 = vsel %vm524, %v443, 0
        %v529 = vsel %vm524, %v483, 0
        %531 = vmatpush.bf16.xpose.msra.mxu0 0
        %532 = vmatpush.bf16.xpose.msra.mxu0 0
        %533 = vmatpush.bf16.xpose.msra.mxu0 0
        %534 = vmatpush.bf16.xpose.msra.mxu0 0
        %535 = vmatpush.bf16.xpose.msra.mxu0 0
        %536 = vmatpush.bf16.xpose.msra.mxu0 0
        %537 = vmatpush.bf16.xpose.msra.mxu0 0
        %538 = vmatpush.bf16.xpose.msra.mxu0 %v529
        %539 = vmatmul.bf16.gmra.mxu0 %v526
        %v540 = vpop.f32.mrf.mxu0
        %v541 = vadd.f32 0.0, %v540
        %v542 = vpop.f32.mrf.mxu0
        %543 = vdwg.mxu0
        %v544 = vsel %vm524, %v541, -inf
        %545 = vmax.xlane.f32.xlu0 %v544
        %v546 = vpop.xlane.xlu0 %545
        %v547 = vsub.f32 %v541, %v546
        %v548 = vmul.f32 %v547, 1.442695
        %v549 = vpow.pop %v548
        %v550 = vsel %vm524, %v549, 0.0
        %551 = vadd.xlane.f32.xlu0 %v550
        %v552 = vpop.xlane.xlu0 %551
        %v553 = vrcp.pop %v552
        %v554 = vmul.f32 %v549, %v553
        %v555 = vpack.c.bf16 %v554, %v554
        %v557 = vsel %vm524, %v555, 0
        %vm559 = vcmask 1043456
        %v561 = vsel %vm559, %v523, 0
        %563 = vmatpush.bf16.msra.mxu0 0
        %564 = vmatpush.bf16.msra.mxu0 0
        %565 = vmatpush.bf16.msra.mxu0 0
        %566 = vmatpush.bf16.msra.mxu0 0
        %567 = vmatpush.bf16.msra.mxu0 0
        %568 = vmatpush.bf16.msra.mxu0 0
        %569 = vmatpush.bf16.msra.mxu0 0
        %570 = vmatpush.bf16.msra.mxu0 %v561
        %571 = vmatmul.bf16.gmra.mxu0 %v557
        %v572 = vpop.f32.mrf.mxu0
        %v573 = vadd.f32 0.0, %v572
        %v574 = vpop.f32.mrf.mxu0
        %575 = vdwg.mxu0
        %576 = vst.msk [vmem:[#allocation2] sm:$0xff] %vm524, %v573
        %v578 = vunpack.c.l.b16 %v443
        %v579 = vpack.c.b16 %v578, %v578
        %580 = vrot.lane.b32.xlu0 %v579, 120
        %v581 = vpop.permute.xlu0 %580
        %v583 = vunpack.c.l.b16 %v483
        %v584 = vpack.c.b16 %v583, %v583
        %585 = vrot.lane.b32.xlu0 %v584, 120
        %v586 = vpop.permute.xlu0 %585
        %v588 = vsel %vm524, %v581, 0
        %v591 = vsel %vm524, %v586, 0
        %593 = vmatpush.bf16.xpose.msra.mxu0 0
        %594 = vmatpush.bf16.xpose.msra.mxu0 0
        %595 = vmatpush.bf16.xpose.msra.mxu0 0
        %596 = vmatpush.bf16.xpose.msra.mxu0 0
        %597 = vmatpush.bf16.xpose.msra.mxu0 0
        %598 = vmatpush.bf16.xpose.msra.mxu0 0
        %599 = vmatpush.bf16.xpose.msra.mxu0 0
        %600 = vmatpush.bf16.xpose.msra.mxu0 %v591
        %601 = vmatmul.bf16.gmra.mxu0 %v588
        %v602 = vpop.f32.mrf.mxu0
        %v603 = vadd.f32 0.0, %v602
        %v604 = vpop.f32.mrf.mxu0
        %605 = vdwg.mxu0
        %v606 = vsel %vm524, %v603, -inf
        %607 = vmax.xlane.f32.xlu0 %v606
        %v608 = vpop.xlane.xlu0 %607
        %v609 = vsub.f32 %v603, %v608
        %v610 = vmul.f32 %v609, 1.442695
        %v611 = vpow.pop %v610
        %v612 = vsel %vm524, %v611, 0.0
        %613 = vadd.xlane.f32.xlu0 %v612
        %v614 = vpop.xlane.xlu0 %613
        %v615 = vrcp.pop %v614
        %v616 = vmul.f32 %v611, %v615
        %v617 = vpack.c.bf16 %v616, %v616
        %v619 = vunpack.c.l.b16 %v523
        %v620 = vpack.c.b16 %v619, %v619
        %621 = vrot.lane.b32.xlu0 %v620, 120
        %v622 = vpop.permute.xlu0 %621
        %v624 = vsel %vm524, %v617, 0
        %v627 = vsel %vm559, %v622, 0
        %629 = vmatpush.bf16.msra.mxu0 0
        %630 = vmatpush.bf16.msra.mxu0 0
        %631 = vmatpush.bf16.msra.mxu0 0
        %632 = vmatpush.bf16.msra.mxu0 0
        %633 = vmatpush.bf16.msra.mxu0 0
        %634 = vmatpush.bf16.msra.mxu0 0
        %635 = vmatpush.bf16.msra.mxu0 0
        %636 = vmatpush.bf16.msra.mxu0 %v627
        %637 = vmatmul.bf16.gmra.mxu0 %v624
        %v638 = vpop.f32.mrf.mxu0
        %v639 = vadd.f32 0.0, %v638
        %v640 = vpop.f32.mrf.mxu0
        %641 = vdwg.mxu0
        %643 = vrot.lane.b32.xlu0 %v639, 8
        %v644 = vpop.permute.xlu0 %643
        %vm646 = vcmask 130112
        %647 = vst.msk [vmem:[#allocation2] sm:$0xff] %vm646, %v644
        %648 = vrot.lane.b32.xlu0 %v579, 112
        %v649 = vpop.permute.xlu0 %648
        %650 = vrot.lane.b32.xlu0 %v584, 112
        %v651 = vpop.permute.xlu0 %650
        %v653 = vsel %vm524, %v649, 0
        %v656 = vsel %vm524, %v651, 0
        %658 = vmatpush.bf16.xpose.msra.mxu0 0
        %659 = vmatpush.bf16.xpose.msra.mxu0 0
        %660 = vmatpush.bf16.xpose.msra.mxu0 0
        %661 = vmatpush.bf16.xpose.msra.mxu0 0
        %662 = vmatpush.bf16.xpose.msra.mxu0 0
        %663 = vmatpush.bf16.xpose.msra.mxu0 0
        %664 = vmatpush.bf16.xpose.msra.mxu0 0
        %665 = vmatpush.bf16.xpose.msra.mxu0 %v656
        %666 = vmatmul.bf16.gmra.mxu0 %v653
        %v667 = vpop.f32.mrf.mxu0
        %v668 = vadd.f32 0.0, %v667
        %v669 = vpop.f32.mrf.mxu0
        %670 = vdwg.mxu0
        %v671 = vsel %vm524, %v668, -inf
        %672 = vmax.xlane.f32.xlu0 %v671
        %v673 = vpop.xlane.xlu0 %672
        %v674 = vsub.f32 %v668, %v673
        %v675 = vmul.f32 %v674, 1.442695
        %v676 = vpow.pop %v675
        %v677 = vsel %vm524, %v676, 0.0
        %678 = vadd.xlane.f32.xlu0 %v677
        %v679 = vpop.xlane.xlu0 %678
        %v680 = vrcp.pop %v679
        %v681 = vmul.f32 %v676, %v680
        %v682 = vpack.c.bf16 %v681, %v681
        %683 = vrot.lane.b32.xlu0 %v620, 112
        %v684 = vpop.permute.xlu0 %683
        %v686 = vsel %vm524, %v682, 0
        %v689 = vsel %vm559, %v684, 0
        %691 = vmatpush.bf16.msra.mxu0 0
        %692 = vmatpush.bf16.msra.mxu0 0
        %693 = vmatpush.bf16.msra.mxu0 0
        %694 = vmatpush.bf16.msra.mxu0 0
        %695 = vmatpush.bf16.msra.mxu0 0
        %696 = vmatpush.bf16.msra.mxu0 0
        %697 = vmatpush.bf16.msra.mxu0 0
        %698 = vmatpush.bf16.msra.mxu0 %v689
        %699 = vmatmul.bf16.gmra.mxu0 %v686
        %v700 = vpop.f32.mrf.mxu0
        %v701 = vadd.f32 0.0, %v700
        %v702 = vpop.f32.mrf.mxu0
        %703 = vdwg.mxu0
        %705 = vrot.lane.b32.xlu0 %v701, 16
        %v706 = vpop.permute.xlu0 %705
        %vm708 = vcmask 195712
        %709 = vst.msk [vmem:[#allocation2] sm:$0xff] %vm708, %v706
        %710 = vrot.lane.b32.xlu0 %v579, 104
        %v711 = vpop.permute.xlu0 %710
        %712 = vrot.lane.b32.xlu0 %v584, 104
        %v713 = vpop.permute.xlu0 %712
        %v715 = vsel %vm524, %v711, 0
        %v718 = vsel %vm524, %v713, 0
        %720 = vmatpush.bf16.xpose.msra.mxu0 0
        %721 = vmatpush.bf16.xpose.msra.mxu0 0
        %722 = vmatpush.bf16.xpose.msra.mxu0 0
        %723 = vmatpush.bf16.xpose.msra.mxu0 0
        %724 = vmatpush.bf16.xpose.msra.mxu0 0
        %725 = vmatpush.bf16.xpose.msra.mxu0 0
        %726 = vmatpush.bf16.xpose.msra.mxu0 0
        %727 = vmatpush.bf16.xpose.msra.mxu0 %v718
        %728 = vmatmul.bf16.gmra.mxu0 %v715
        %v729 = vpop.f32.mrf.mxu0
        %v730 = vadd.f32 0.0, %v729
        %v731 = vpop.f32.mrf.mxu0
        %732 = vdwg.mxu0
        %v733 = vsel %vm524, %v730, -inf
        %734 = vmax.xlane.f32.xlu0 %v733
        %v735 = vpop.xlane.xlu0 %734
        %v736 = vsub.f32 %v730, %v735
        %v737 = vmul.f32 %v736, 1.442695
        %v738 = vpow.pop %v737
        %v739 = vsel %vm524, %v738, 0.0
        %740 = vadd.xlane.f32.xlu0 %v739
        %v741 = vpop.xlane.xlu0 %740
        %v742 = vrcp.pop %v741
        %v743 = vmul.f32 %v738, %v742
        %v744 = vpack.c.bf16 %v743, %v743
        %745 = vrot.lane.b32.xlu0 %v620, 104
        %v746 = vpop.permute.xlu0 %745
        %v748 = vsel %vm524, %v744, 0
        %v751 = vsel %vm559, %v746, 0
        %753 = vmatpush.bf16.msra.mxu0 0
        %754 = vmatpush.bf16.msra.mxu0 0
        %755 = vmatpush.bf16.msra.mxu0 0
        %756 = vmatpush.bf16.msra.mxu0 0
        %757 = vmatpush.bf16.msra.mxu0 0
        %758 = vmatpush.bf16.msra.mxu0 0
        %759 = vmatpush.bf16.msra.mxu0 0
        %760 = vmatpush.bf16.msra.mxu0 %v751
        %761 = vmatmul.bf16.gmra.mxu0 %v748
        %v762 = vpop.f32.mrf.mxu0
        %v763 = vadd.f32 0.0, %v762
        %v764 = vpop.f32.mrf.mxu0
        %765 = vdwg.mxu0
        %767 = vrot.lane.b32.xlu0 %v763, 24
        %v768 = vpop.permute.xlu0 %767
        %vm770 = vcmask 261312
        %771 = vst.msk [vmem:[#allocation2] sm:$0xff] %vm770, %v768
        %v772 = vld [vmem:[#allocation2] sm:$0xff]
        %v773 = vpack.c.bf16 %v772, %v772
        %v774 = vld [vmem:[#allocation11] sm:$0xf]
        %v775 = vld [vmem:[#allocation11 + $0x4] sm:$0xf]
        %v776 = vld [vmem:[#allocation11 + $0x8] sm:$0xf]
        %v777 = vld [vmem:[#allocation11 + $0xc] sm:$0xf]
        %v778 = vld [vmem:[%s6] sm:$0x1]
        %v780 = vperm.slane %v778, 0
        %v786 = vunpack.c.l.b16 %v774
        %v787 = vunpack.c.l.b16 %v775
        %v788 = vunpack.c.l.b16 %v776
        %v789 = vunpack.c.l.b16 %v777
        %v790 = vpack.c.b16 %v787, %v786
        %v791 = vpack.c.b16 %v789, %v788
        %v795 = vsel %vm426, %v773, 0
        %797 = vmatpush.bf16.msra.mxu0 0
        %798 = vmatpush.bf16.msra.mxu0 0
        %799 = vmatpush.bf16.msra.mxu0 0
        %800 = vmatpush.bf16.msra.mxu0 0
        %801 = vmatpush.bf16.msra.mxu0 0
        %802 = vmatpush.bf16.msra.mxu0 0
        %803 = vmatpush.bf16.msra.mxu0 %v791
        %804 = vmatpush.bf16.msra.mxu0 %v790
        %805 = vmatmul.bf16.gmra.mxu0 %v795
        %v806 = vpop.f32.mrf.mxu0
        %v807 = vadd.f32 %v780, %v806
        %v808 = vpop.f32.mrf.mxu0
        %809 = vdwg.mxu0
        %810 = vst.msk [vmem:[%s403] sm:$0xff] %vm426, %v807
        %s811 = sand.u32 %s198, 1
        %s812 = scalar_lea.sflag [#allocation5], %s811
        %s813 = sand.u32 %s198, 1
        %s814 = smul.addr %s813, 8
        %s815 = scalar_lea.vmem [#allocation12], %s814
        // Predicated region
        $region69: #{tpu_custom_call.1} parent=47 // pred_check
          %p816 = pneg %p208
        $region70: #{tpu_custom_call.1} parent=47 // pred_check_branch
          %818 = sbr.rel (%p816) target = $region72
        $region71: #{tpu_custom_call.1} parent=47 // pred_region
          %820 = vsyncadd %s812, 0
          %s821 = smul.addr %s28, 8
          %s822 = scalar_lea.hbm %s7, %s821
          %s824 = sshll.u32 %s815, 4
          %s825 = int_to_ptr.vmem [resolvable:$true] %s824
          %s826 = sshll.u32 %s822, 4
          %s827 = int_to_ptr.hbm [resolvable:$true] %s826
          %829 = dma.vmem_to_hbm [thread:$0]  %s825, 128, %s827, %s812
        $region72: #{tpu_custom_call.1} parent=47 // pred_fallthru
          _
      $region48: #{tpu_custom_call.1} parent=5 // pred_fallthru
        _
      %p830 = scmp.le.s32.totalorder 2, %s23
      // Predicated region
      $region73: #{tpu_custom_call.1} parent=5 // pred_check
        %p831 = pneg %p830
      $region74: #{tpu_custom_call.1} parent=5 // pred_check_branch
        %833 = sbr.rel (%p831) target = $region76
      $region75: #{tpu_custom_call.1} parent=5 // pred_region
        %s834 = ssub.s32 %s23, 2
        // Predicated region
        $region77: #{tpu_custom_call.1} parent=75 // pred_check
          %p835 = pneg %p214
        $region78: #{tpu_custom_call.1} parent=75 // pred_check_branch
          %837 = sbr.rel (%p835) target = $region80
        $region79: #{tpu_custom_call.1} parent=75 // pred_region
          %s838 = sand.u32 %s199, 1
          %s839 = scalar_lea.sflag [#allocation5], %s838
          %s840 = sand.u32 %s199, 1
          %s841 = smul.addr %s840, 8
          %s842 = scalar_lea.vmem [#allocation12], %s841
          %844 = dma.done %s839, 128
        $region80: #{tpu_custom_call.1} parent=75 // pred_fallthru
          _
      $region76: #{tpu_custom_call.1} parent=5 // pred_fallthru
        _
    $region6: #{tpu_custom_call.1} parent=1 // loop_footer
      %s27 = sadd.s32 1, %s23
    $region7: #{tpu_custom_call.1} parent=1 // loop_footer_branch
      %22 = sbr.rel target = $region3
    $region8: #{tpu_custom_call.1} parent=1 // loop_exit
      _
    %845 = vsyncpa [#allocation4], 1
    %s846 = scalar_lea.sflag [#allocation4], 1
    %847 = vsyncpa %s846, 1
    %848 = vsyncpa [#allocation7], 1
    %s849 = scalar_lea.sflag [#allocation7], 1
    %850 = vsyncpa %s849, 1
    %851 = vsyncpa [#allocation10], 1
    %852 = vsyncpa [#allocation5], 1
    %s853 = scalar_lea.sflag [#allocation5], 1
    %854 = vsyncpa %s853, 1

</llo_original>
